<compile_context>
chip_gen: v6e
topology: v6e:2x2x1
jax: 0.10.0
libtpu: 0.0.40
codegen_flags: <defaults>
</compile_context>

<pallas_src>
import functools
import numpy as np
import jax
import jax.numpy as jnp
from jax.experimental import pallas as pl
from jax.experimental.pallas import tpu as pltpu


_TILE = 512          # K-block edge: 512x512 f32 = 1 MiB per block, safe on v5e/v6e/v7x
_LANE = 128

# Set to jnp.bfloat16 on v6e/v7x for ~1.5-2x on the EUP-bound exp() phase.  Kept f32 by
# default so the fp32-parity tolerance check at the bottom of this script holds exactly.
_COMPUTE_DTYPE = jnp.float32


def _round_up(x, m):
    return (x + m - 1) // m * m


def _masked_kernel_sums_kernel(z_row_ref, z_col_ref, p_ref, q_ref, s_ref, acc_ref):
    # grid = (num_j, num_i): program_id(0) = j (parallel), program_id(1) = i (reduction)
    i = pl.program_id(1)

    @pl.when(i == 0)
    def _init():
        acc_ref[...] = jnp.zeros_like(acc_ref)

    # RBF kernel block: feature dim is 1, so the PyTorch `.pow(2).mean(2)/dim`
    # collapses to a plain squared difference.
    d = z_col_ref[...] - z_row_ref[...]                 # (TI, TJ) broadcasted difference
    k = jnp.exp(-(d * d))                               # EUP-bound exp: the hot loop
    t = jnp.dot(p_ref[...], k, preferred_element_type=jnp.float32)   # (Mpad, TJ) on MXU
    tq = t * q_ref[...].astype(jnp.float32)             # mask the j columns

    # Fold TJ lanes down to one 128-lane column with static, lane-tile-aligned slices:
    # pure VPU adds, no per-step XLU lane-reduce or lane-broadcast.
    tj = tq.shape[1]
    partial = tq[:, 0:_LANE]
    for c in range(1, tj // _LANE):
        partial = partial + tq[:, c * _LANE:(c + 1) * _LANE]
    acc_ref[...] += partial

    @pl.when(i == pl.num_programs(1) - 1)
    def _flush():
        s_ref[...] = acc_ref[...]                       # one lane-dense store per j-block


@jax.jit
def masked_kernel_sums(outputs, p_masks, q_masks):
    """S[m] = sum_{i,j} P[m,i] * exp(-(z_i - z_j)^2) * Q[m,j], with z = logsigmoid(outputs)."""
    n = outputs.shape[0]
    m = p_masks.shape[0]

    n128 = _round_up(max(n, 1), _LANE)
    tile = min(_TILE, n128)
    n_pad = _round_up(n128, tile)
    m_pad = _round_up(max(m, 1), 8)
    num_i = n_pad // tile
    num_j = n_pad // tile

    # Hoisted log-sigmoid: computed once on the (N,) vector outside the kernel.
    o = jnp.zeros((n_pad,), jnp.float32).at[:n].set(outputs.astype(jnp.float32))
    z = jax.nn.log_sigmoid(o).astype(_COMPUTE_DTYPE)
    z_row = z.reshape(1, n_pad)
    z_col = z.reshape(n_pad, 1)

    # Padding correctness relies on P/Q columns beyond n being zero (padded rows/cols of
    # K are finite but killed by the zero mask entries).
    p = jnp.zeros((m_pad, n_pad), _COMPUTE_DTYPE).at[:m, :n].set(p_masks.astype(_COMPUTE_DTYPE))
    q = jnp.zeros((m_pad, n_pad), _COMPUTE_DTYPE).at[:m, :n].set(q_masks.astype(_COMPUTE_DTYPE))

    out = pl.pallas_call(
        _masked_kernel_sums_kernel,
        out_shape=jax.ShapeDtypeStruct((m_pad, _LANE * num_j), jnp.float32),
        grid_spec=pltpu.PrefetchScalarGridSpec(
            num_scalar_prefetch=0,
            grid=(num_j, num_i),                          # reduction axis (i) last
            in_specs=[
                pl.BlockSpec((1, tile), lambda j, i: (0, j)),       # z_row strip (K columns)
                pl.BlockSpec((tile, 1), lambda j, i: (i, 0)),       # z_col strip (K rows)
                pl.BlockSpec((m_pad, tile), lambda j, i: (0, i)),   # P strip over i
                pl.BlockSpec((m_pad, tile), lambda j, i: (0, j)),   # Q strip over j
            ],
            out_specs=pl.BlockSpec((m_pad, _LANE), lambda j, i: (0, j)),
            scratch_shapes=[pltpu.VMEM((m_pad, _LANE), jnp.float32)],
        ),
        compiler_params=pltpu.CompilerParams(
            dimension_semantics=("parallel", "arbitrary"),
            vmem_limit_bytes=32 * 1024 * 1024,
        ),
    )(z_row, z_col, p, q)

    # Each output column block holds 128 lane-partials for its j-block; sum them all.
    s = out.sum(axis=1)
    return s[:m]


class MMDLoss:
    """JAX/Pallas port of the PyTorch MMDLoss module (no learnable params)."""

    def __init__(self, fair_criteria):
        assert fair_criteria in ("EqOdd", "EqOpp")
        self.fair_criteria = fair_criteria

    def __call__(self, outputs, labels, group):
        # Host-side glue: data-dependent subset selection (labels == l, group.unique())
        # becomes boolean mask rows + scalar weights; all heavy compute (kernel matrix +
        # masked reductions) happens inside the Pallas kernel.
        # TODO(synk): np.unique/mask construction is data-dependent host work, so this
        # wrapper cannot sit under jax.jit end-to-end.
        labels_np = np.asarray(labels)
        group_np = np.asarray(group)
        unique_labels = [0, 1] if self.fair_criteria == "EqOdd" else [0]

        p_rows, q_rows, weights = [], [], []
        for lab in unique_labels:
            lab_mask = labels_np == lab
            nb = int(lab_mask.sum())
            if nb == 0:
                print("Skipping regularization due to no samples")
                continue
            groups_in = np.unique(group_np[lab_mask])
            if len(groups_in) == 1:
                continue  # compute_mmd_group returns 0 for a single group
            ng = len(groups_in)
            b = lab_mask.astype(np.float32)
            # Deduplicated S(b,b): appears ng times with weight 1/(ng*nb^2) -> once, 1/nb^2.
            p_rows.append(b)
            q_rows.append(b)
            weights.append(1.0 / (nb * nb))
            for g in groups_in:
                a = (lab_mask & (group_np == g)).astype(np.float32)
                na = int(a.sum())
                # mmd(x_A, x_B) = S(a,a)/na^2 + S(b,b)/nb^2 - 2*S(a,b)/(na*nb)
                p_rows += [a, a]
                q_rows += [a, b]
                weights += [1.0 / (ng * na * na), -2.0 / (ng * na * nb)]

        if not p_rows:
            return jnp.zeros((1,), jnp.float32)

        p = np.stack(p_rows, axis=0)
        q = np.stack(q_rows, axis=0)
        w = jnp.asarray(np.array(weights, dtype=np.float32))
        s = masked_kernel_sums(jnp.asarray(outputs), jnp.asarray(p), jnp.asarray(q))
        return jnp.sum(w * s).reshape(1).astype(jnp.float32)


# ----------------------- pure-numpy reference (for checking) -----------------------
def _ref_kernel(x, y):
    d = (x[:, None, :] - y[None, :, :]) ** 2
    return np.exp(-(d.mean(axis=2) / x.shape[1]))


def _ref_mmd(x, y):
    return (_ref_kernel(x, x).mean() + _ref_kernel(y, y).mean()
            - 2.0 * _ref_kernel(x, y).mean())


def mmd_loss_ref(outputs, labels, group, fair_criteria):
    o = np.asarray(outputs, np.float64)
    z = np.where(o >= 0, -np.log1p(np.exp(-o)), o - np.log1p(np.exp(o)))
    x = z[:, None]
    labels_np = np.asarray(labels)
    group_np = np.asarray(group)
    total = 0.0
    unique_labels = [0, 1] if fair_criteria == "EqOdd" else [0]
    for lab in unique_labels:
        m = labels_np == lab
        if m.sum() == 0:
            continue
        xs, gs = x[m], group_np[m]
        ug = np.unique(gs)
        if len(ug) == 1:
            continue
        acc = 0.0
        for g in ug:
            acc += _ref_mmd(xs[gs == g], xs)
        total += acc / len(ug)
    return np.float32(total)


if __name__ == "__main__":
    key = jax.random.PRNGKey(0)
    N = 8  # seq of logits
    outputs = jax.random.normal(key, (N,), dtype=jnp.float32)
    # Deterministic labels/groups that guarantee both labels and >1 group per label.
    labels = jnp.array([0, 0, 0, 0, 1, 1, 1, 1], dtype=jnp.int32)
    group = jnp.array([0, 1, 0, 1, 0, 1, 1, 0], dtype=jnp.int32)

    for crit in ("EqOdd", "EqOpp"):
        loss_mod = MMDLoss(crit)
        mmd = jax.block_until_ready(loss_mod(outputs, labels, group))
        ref = mmd_loss_ref(np.asarray(outputs), np.asarray(labels), np.asarray(group), crit)
        assert mmd.shape == (1,)
        assert np.allclose(np.asarray(mmd)[0], ref, rtol=1e-4, atol=1e-5), \
            (crit, np.asarray(mmd), ref)
    print("KERNEL_OK")
</pallas_src>

<mosaic_0001>
module attributes {stable_mosaic.version = 11 : i64} {
  func.func @_masked_kernel_sums_kernel(%arg0: i32, %arg1: i32, %arg2: memref<1x128xf32, #tpu.memory_space<vmem>>, %arg3: memref<128x1xf32, #tpu.memory_space<vmem>>, %arg4: memref<16x128xf32, #tpu.memory_space<vmem>>, %arg5: memref<16x128xf32, #tpu.memory_space<vmem>>, %arg6: memref<16x128xf32, #tpu.memory_space<vmem>>, %arg7: memref<16x128xf32, #tpu.memory_space<vmem>>) attributes {dimension_semantics = [#tpu.dimension_semantics<parallel>, #tpu.dimension_semantics<arbitrary>], iteration_bounds = array<i64: 1, 1>, scalar_prefetch = 0 : i64, scratch_operands = 1 : i64, tpu.core_type = #tpu.core_type<tc>, window_params = [{transform_indices = @transform_0, window_bounds = array<i64: 1, 128>}, {transform_indices = @transform_1, window_bounds = array<i64: 128, 1>}, {transform_indices = @transform_2, window_bounds = array<i64: 16, 128>}, {transform_indices = @transform_3, window_bounds = array<i64: 16, 128>}, {transform_indices = @transform_4, window_bounds = array<i64: 16, 128>}]} {
    %c0_i32 = arith.constant 0 : i32
    %0 = arith.cmpi eq, %arg1, %c0_i32 : i32
    %1 = arith.extui %0 : i1 to i32
    %c0_i32_0 = arith.constant 0 : i32
    %2 = arith.cmpi ne, %1, %c0_i32_0 : i32
    scf.if %2 {
      %cst_15 = arith.constant 0.000000e+00 : f32
      %22 = vector.broadcast %cst_15 : f32 to vector<16x128xf32>
      %c0_16 = arith.constant 0 : index
      %c0_17 = arith.constant 0 : index
      %23 = vector.load %arg7[%c0_16, %c0_17] : memref<16x128xf32, #tpu.memory_space<vmem>>, vector<16x128xf32>
      tpu.vector_store %arg7[%c0_16, %c0_17], %22 {strides = array<i32>} : memref<16x128xf32, #tpu.memory_space<vmem>>, vector<16x128xf32>,
    } else {
    }
    %c0 = arith.constant 0 : index
    %c0_1 = arith.constant 0 : index
    %3 = vector.load %arg3[%c0, %c0_1] : memref<128x1xf32, #tpu.memory_space<vmem>>, vector<128x1xf32>
    %c0_2 = arith.constant 0 : index
    %c0_3 = arith.constant 0 : index
    %4 = vector.load %arg2[%c0_2, %c0_3] : memref<1x128xf32, #tpu.memory_space<vmem>>, vector<1x128xf32>
    %5 = vector.broadcast %3 : vector<128x1xf32> to vector<128x128xf32>
    %6 = vector.broadcast %4 : vector<1x128xf32> to vector<128x128xf32>
    %7 = arith.subf %5, %6 : vector<128x128xf32>
    %8 = arith.mulf %7, %7 : vector<128x128xf32>
    %cst = arith.constant 0.000000e+00 : f32
    %9 = vector.broadcast %cst : f32 to vector<128x128xf32>
    %10 = arith.subf %9, %8 : vector<128x128xf32>
    %11 = math.exp %10 : vector<128x128xf32>
    %c0_4 = arith.constant 0 : index
    %c0_5 = arith.constant 0 : index
    %12 = vector.load %arg4[%c0_4, %c0_5] : memref<16x128xf32, #tpu.memory_space<vmem>>, vector<16x128xf32>
    %cst_6 = arith.constant dense<0.000000e+00> : vector<16x128xf32>
    %13 = tpu.matmul %12, %11, %cst_6 {dimension_numbers = #tpu.dot_dimension_numbers<[1], [0], [0], [1], [0, 0, 1, 1], [], []>} : vector<16x128xf32>, vector<128x128xf32>, vector<16x128xf32> -> vector<16x128xf32>
    %c0_7 = arith.constant 0 : index
    %c0_8 = arith.constant 0 : index
    %14 = vector.load %arg5[%c0_7, %c0_8] : memref<16x128xf32, #tpu.memory_space<vmem>>, vector<16x128xf32>
    %15 = arith.mulf %13, %14 : vector<16x128xf32>
    %c0_9 = arith.constant 0 : index
    %c0_10 = arith.constant 0 : index
    %16 = vector.load %arg7[%c0_9, %c0_10] : memref<16x128xf32, #tpu.memory_space<vmem>>, vector<16x128xf32>
    %17 = arith.addf %16, %15 : vector<16x128xf32>
    %c0_11 = arith.constant 0 : index
    %c0_12 = arith.constant 0 : index
    %18 = vector.load %arg7[%c0_11, %c0_12] : memref<16x128xf32, #tpu.memory_space<vmem>>, vector<16x128xf32>
    tpu.vector_store %arg7[%c0_11, %c0_12], %17 {strides = array<i32>} : memref<16x128xf32, #tpu.memory_space<vmem>>, vector<16x128xf32>,
    %c0_i32_13 = arith.constant 0 : i32
    %19 = arith.cmpi eq, %arg1, %c0_i32_13 : i32
    %20 = arith.extui %19 : i1 to i32
    %c0_i32_14 = arith.constant 0 : i32
    %21 = arith.cmpi ne, %20, %c0_i32_14 : i32
    scf.if %21 {
      %c0_15 = arith.constant 0 : index
      %c0_16 = arith.constant 0 : index
      %22 = vector.load %arg7[%c0_15, %c0_16] : memref<16x128xf32, #tpu.memory_space<vmem>>, vector<16x128xf32>
      %c0_17 = arith.constant 0 : index
      %c0_18 = arith.constant 0 : index
      %23 = vector.load %arg6[%c0_17, %c0_18] : memref<16x128xf32, #tpu.memory_space<vmem>>, vector<16x128xf32>
      tpu.vector_store %arg6[%c0_17, %c0_18], %22 {strides = array<i32>} : memref<16x128xf32, #tpu.memory_space<vmem>>, vector<16x128xf32>,
    } else {
    }
    return
  }
  func.func @transform_0(%arg0: i32, %arg1: i32) -> (i32, i32) {
    %c0_i32 = arith.constant 0 : i32
    %c0_i32_0 = arith.constant 0 : i32
    return %c0_i32, %arg0 : i32, i32
  }
  func.func @transform_1(%arg0: i32, %arg1: i32) -> (i32, i32) {
    %c0_i32 = arith.constant 0 : i32
    %c0_i32_0 = arith.constant 0 : i32
    return %arg1, %c0_i32 : i32, i32
  }
  func.func @transform_2(%arg0: i32, %arg1: i32) -> (i32, i32) {
    %c0_i32 = arith.constant 0 : i32
    %c0_i32_0 = arith.constant 0 : i32
    return %c0_i32, %arg1 : i32, i32
  }
  func.func @transform_3(%arg0: i32, %arg1: i32) -> (i32, i32) {
    %c0_i32 = arith.constant 0 : i32
    %c0_i32_0 = arith.constant 0 : i32
    return %c0_i32, %arg0 : i32, i32
  }
  func.func @transform_4(%arg0: i32, %arg1: i32) -> (i32, i32) {
    %c0_i32 = arith.constant 0 : i32
    %c0_i32_0 = arith.constant 0 : i32
    return %c0_i32, %arg0 : i32, i32
  }
}

</mosaic_0001>

<llo_original>
// kernel: masked_kernel_sums.1
$region0: #{masked_kernel_sums.1}
  #allocation0 [shape = 'u32[]', space=smem, size = 0x4, offset = 0x4, fixed_abs, tag = 'smem constant byte address 0x4 - core index']
  #allocation1 [shape = 'u32[144,128]{1,0:T(1,128)}', space=vmem, size = 0x12000, scoped, tag = 'internal scratch']
  #allocation2 [shape = 'f32[16,128]{1,0:T(8,128)}', space=vmem, size = 0x2000, scoped, tag = 'scratch operand']
  %s0 = inlined_call_operand.vmem [shape: f32[1,128], index: 0, kind: input, shape index: {}]
  %s1 = inlined_call_operand.vmem [shape: f32[128,1], index: 1, kind: input, shape index: {}]
  %s2 = inlined_call_operand.vmem [shape: f32[16,128], index: 2, kind: input, shape index: {}]
  %s3 = inlined_call_operand.vmem [shape: f32[16,128], index: 3, kind: input, shape index: {}]
  %s4 = inlined_call_operand.vmem [shape: f32[16,128], index: 4, kind: output, shape index: {}]
  %s5 = sld [smem:[#allocation0]]
  $region34: #{masked_kernel_sums.1} parent=0
    _
  %s7 = ssub.s32 1, %s5
  %s8 = scalar_select 0, %s7, %s5
  // Predicated region
  $region2: #{masked_kernel_sums.1} parent=0 // pred_check
    _
  $region3: #{masked_kernel_sums.1} parent=0 // pred_check_branch
    %10 = sbr.rel (0) target = $region5
  $region4: #{masked_kernel_sums.1} parent=0 // pred_region
    _
  $region5: #{masked_kernel_sums.1} parent=0 // pred_fallthru
    _
  // Predicated region
  $region6: #{masked_kernel_sums.1} parent=0 // pred_check
    _
  $region7: #{masked_kernel_sums.1} parent=0 // pred_check_branch
    %12 = sbr.rel (0) target = $region9
  $region8: #{masked_kernel_sums.1} parent=0 // pred_region
    _
  $region9: #{masked_kernel_sums.1} parent=0 // pred_fallthru
    _
  // Predicated region
  $region10: #{masked_kernel_sums.1} parent=0 // pred_check
    _
  $region11: #{masked_kernel_sums.1} parent=0 // pred_check_branch
    %14 = sbr.rel (0) target = $region13
  $region12: #{masked_kernel_sums.1} parent=0 // pred_region
    _
  $region13: #{masked_kernel_sums.1} parent=0 // pred_fallthru
    _
  // Predicated region
  $region14: #{masked_kernel_sums.1} parent=0 // pred_check
    _
  $region15: #{masked_kernel_sums.1} parent=0 // pred_check_branch
    %16 = sbr.rel (0) target = $region17
  $region16: #{masked_kernel_sums.1} parent=0 // pred_region
    _
  $region17: #{masked_kernel_sums.1} parent=0 // pred_fallthru
    _
  %p17 = scmp.eq.s32.totalorder 0, 0
  // Predicated region
  $region18: #{masked_kernel_sums.1} parent=0 // pred_check
    %p18 = pneg %p17
  $region19: #{masked_kernel_sums.1} parent=0 // pred_check_branch
    %20 = sbr.rel (%p18) target = $region21
  $region20: #{masked_kernel_sums.1} parent=0 // pred_region
    %21 = vst [vmem:[#allocation2] sm:$0xff] 0.0
    %22 = vst [vmem:[#allocation2 + $0x8] sm:$0xff] 0.0
  $region21: #{masked_kernel_sums.1} parent=0 // pred_fallthru
    _
  %v23 = vld [vmem:[%s1] sm:$0xff]
  %v24 = vld [vmem:[%s1 + $0x8] sm:$0xff]
  %v25 = vld [vmem:[%s1 + $0x10] sm:$0xff]
  %v26 = vld [vmem:[%s1 + $0x18] sm:$0xff]
  %v27 = vld [vmem:[%s1 + $0x20] sm:$0xff]
  %v28 = vld [vmem:[%s1 + $0x28] sm:$0xff]
  %v29 = vld [vmem:[%s1 + $0x30] sm:$0xff]
  %v30 = vld [vmem:[%s1 + $0x38] sm:$0xff]
  %v31 = vld [vmem:[%s1 + $0x40] sm:$0xff]
  %v32 = vld [vmem:[%s1 + $0x48] sm:$0xff]
  %v33 = vld [vmem:[%s1 + $0x50] sm:$0xff]
  %v34 = vld [vmem:[%s1 + $0x58] sm:$0xff]
  %v35 = vld [vmem:[%s1 + $0x60] sm:$0xff]
  %v36 = vld [vmem:[%s1 + $0x68] sm:$0xff]
  %v37 = vld [vmem:[%s1 + $0x70] sm:$0xff]
  %v38 = vld [vmem:[%s1 + $0x78] sm:$0xff]
  %v39 = vld [vmem:[%s0] sm:$0x1]
  %41 = vset.pattern.permute.xlu0 0
  %42 = vperm.xlu0 %41, %v23
  %v43 = vpop.permute.xlu0 %42
  %46 = vset.pattern.permute.xlu0 0
  %47 = vperm.xlu0 %46, %v24
  %v48 = vpop.permute.xlu0 %47
  %51 = vset.pattern.permute.xlu0 0
  %52 = vperm.xlu0 %51, %v25
  %v53 = vpop.permute.xlu0 %52
  %56 = vset.pattern.permute.xlu0 0
  %57 = vperm.xlu0 %56, %v26
  %v58 = vpop.permute.xlu0 %57
  %61 = vset.pattern.permute.xlu0 0
  %62 = vperm.xlu0 %61, %v27
  %v63 = vpop.permute.xlu0 %62
  %66 = vset.pattern.permute.xlu0 0
  %67 = vperm.xlu0 %66, %v28
  %v68 = vpop.permute.xlu0 %67
  %71 = vset.pattern.permute.xlu0 0
  %72 = vperm.xlu0 %71, %v29
  %v73 = vpop.permute.xlu0 %72
  %76 = vset.pattern.permute.xlu0 0
  %77 = vperm.xlu0 %76, %v30
  %v78 = vpop.permute.xlu0 %77
  %81 = vset.pattern.permute.xlu0 0
  %82 = vperm.xlu0 %81, %v31
  %v83 = vpop.permute.xlu0 %82
  %86 = vset.pattern.permute.xlu0 0
  %87 = vperm.xlu0 %86, %v32
  %v88 = vpop.permute.xlu0 %87
  %91 = vset.pattern.permute.xlu0 0
  %92 = vperm.xlu0 %91, %v33
  %v93 = vpop.permute.xlu0 %92
  %96 = vset.pattern.permute.xlu0 0
  %97 = vperm.xlu0 %96, %v34
  %v98 = vpop.permute.xlu0 %97
  %101 = vset.pattern.permute.xlu0 0
  %102 = vperm.xlu0 %101, %v35
  %v103 = vpop.permute.xlu0 %102
  %106 = vset.pattern.permute.xlu0 0
  %107 = vperm.xlu0 %106, %v36
  %v108 = vpop.permute.xlu0 %107
  %111 = vset.pattern.permute.xlu0 0
  %112 = vperm.xlu0 %111, %v37
  %v113 = vpop.permute.xlu0 %112
  %116 = vset.pattern.permute.xlu0 0
  %117 = vperm.xlu0 %116, %v38
  %v118 = vpop.permute.xlu0 %117
  %v121 = vlaneseq
  %v122 = vshrl.u32 %v121, 7
  %v123 = vsub.s32 0, %v122
  %v124 = vrot.slane %v39, %v123
  %v126 = vsub.f32 %v43, %v124
  %v127 = vsub.f32 %v48, %v124
  %v128 = vsub.f32 %v53, %v124
  %v129 = vsub.f32 %v58, %v124
  %v130 = vsub.f32 %v63, %v124
  %v131 = vsub.f32 %v68, %v124
  %v132 = vsub.f32 %v73, %v124
  %v133 = vsub.f32 %v78, %v124
  %v134 = vsub.f32 %v83, %v124
  %v135 = vsub.f32 %v88, %v124
  %v136 = vsub.f32 %v93, %v124
  %v137 = vsub.f32 %v98, %v124
  %v138 = vsub.f32 %v103, %v124
  %v139 = vsub.f32 %v108, %v124
  %v140 = vsub.f32 %v113, %v124
  %v141 = vsub.f32 %v118, %v124
  %v142 = vmul.f32 %v126, %v126
  %v143 = vmul.f32 %v127, %v127
  %v144 = vmul.f32 %v128, %v128
  %v145 = vmul.f32 %v129, %v129
  %v146 = vmul.f32 %v130, %v130
  %v147 = vmul.f32 %v131, %v131
  %v148 = vmul.f32 %v132, %v132
  %v149 = vmul.f32 %v133, %v133
  %v150 = vmul.f32 %v134, %v134
  %v151 = vmul.f32 %v135, %v135
  %v152 = vmul.f32 %v136, %v136
  %v153 = vmul.f32 %v137, %v137
  %v154 = vmul.f32 %v138, %v138
  %v155 = vmul.f32 %v139, %v139
  %v156 = vmul.f32 %v140, %v140
  %v157 = vmul.f32 %v141, %v141
  %v158 = vsub.f32 0.0, %v142
  %v159 = vsub.f32 0.0, %v143
  %v160 = vsub.f32 0.0, %v144
  %v161 = vsub.f32 0.0, %v145
  %v162 = vsub.f32 0.0, %v146
  %v163 = vsub.f32 0.0, %v147
  %v164 = vsub.f32 0.0, %v148
  %v165 = vsub.f32 0.0, %v149
  %v166 = vsub.f32 0.0, %v150
  %v167 = vsub.f32 0.0, %v151
  %v168 = vsub.f32 0.0, %v152
  %v169 = vsub.f32 0.0, %v153
  %v170 = vsub.f32 0.0, %v154
  %v171 = vsub.f32 0.0, %v155
  %v172 = vsub.f32 0.0, %v156
  %v173 = vsub.f32 0.0, %v157
  %v174 = vmul.f32 %v158, 1.442695
  %v175 = vpow.pop %v174
  %v176 = vmul.f32 %v159, 1.442695
  %v177 = vpow.pop %v176
  %v178 = vmul.f32 %v160, 1.442695
  %v179 = vpow.pop %v178
  %v180 = vmul.f32 %v161, 1.442695
  %v181 = vpow.pop %v180
  %v182 = vmul.f32 %v162, 1.442695
  %v183 = vpow.pop %v182
  %v184 = vmul.f32 %v163, 1.442695
  %v185 = vpow.pop %v184
  %v186 = vmul.f32 %v164, 1.442695
  %v187 = vpow.pop %v186
  %v188 = vmul.f32 %v165, 1.442695
  %v189 = vpow.pop %v188
  %v190 = vmul.f32 %v166, 1.442695
  %v191 = vpow.pop %v190
  %v192 = vmul.f32 %v167, 1.442695
  %v193 = vpow.pop %v192
  %v194 = vmul.f32 %v168, 1.442695
  %v195 = vpow.pop %v194
  %v196 = vmul.f32 %v169, 1.442695
  %v197 = vpow.pop %v196
  %v198 = vmul.f32 %v170, 1.442695
  %v199 = vpow.pop %v198
  %v200 = vmul.f32 %v171, 1.442695
  %v201 = vpow.pop %v200
  %v202 = vmul.f32 %v172, 1.442695
  %v203 = vpow.pop %v202
  %v204 = vmul.f32 %v173, 1.442695
  %v205 = vpow.pop %v204
  %v206 = vld [vmem:[%s2] sm:$0xff]
  %v207 = vld [vmem:[%s2 + $0x8] sm:$0xff]
  %208 = vmatprep.subr.mxu0 0.0
  %209 = vmatpush1.msra.mxu0 %v205
  %210 = vmatprep.subr.mxu0 0.0
  %211 = vmatpush1.msra.mxu0 %v203
  %212 = vmatprep.subr.mxu0 0.0
  %213 = vmatpush1.msra.mxu0 %v201
  %214 = vmatprep.subr.mxu0 0.0
  %215 = vmatpush1.msra.mxu0 %v199
  %216 = vmatprep.subr.mxu0 0.0
  %217 = vmatpush1.msra.mxu0 %v197
  %218 = vmatprep.subr.mxu0 0.0
  %219 = vmatpush1.msra.mxu0 %v195
  %220 = vmatprep.subr.mxu0 0.0
  %221 = vmatpush1.msra.mxu0 %v193
  %222 = vmatprep.subr.mxu0 0.0
  %223 = vmatpush1.msra.mxu0 %v191
  %224 = vmatprep.subr.mxu0 0.0
  %225 = vmatpush1.msra.mxu0 %v189
  %226 = vmatprep.subr.mxu0 0.0
  %227 = vmatpush1.msra.mxu0 %v187
  %228 = vmatprep.subr.mxu0 0.0
  %229 = vmatpush1.msra.mxu0 %v185
  %230 = vmatprep.subr.mxu0 0.0
  %231 = vmatpush1.msra.mxu0 %v183
  %232 = vmatprep.subr.mxu0 0.0
  %233 = vmatpush1.msra.mxu0 %v181
  %234 = vmatprep.subr.mxu0 0.0
  %235 = vmatpush1.msra.mxu0 %v179
  %236 = vmatprep.subr.mxu0 0.0
  %237 = vmatpush1.msra.mxu0 %v177
  %238 = vmatprep.subr.mxu0 0.0
  %239 = vmatpush1.msra.mxu0 %v175
  %240 = vmatprep.subr.mxu0 0.0
  %241 = vmatpush2.msra.mxu0 0.0
  %242 = vmatprep.subr.mxu0 0.0
  %243 = vmatpush2.msra.mxu0 0.0
  %244 = vmatprep.subr.mxu0 0.0
  %245 = vmatpush2.msra.mxu0 0.0
  %246 = vmatprep.subr.mxu0 0.0
  %247 = vmatpush2.msra.mxu0 0.0
  %248 = vmatprep.subr.mxu0 0.0
  %249 = vmatpush2.msra.mxu0 0.0
  %250 = vmatprep.subr.mxu0 0.0
  %251 = vmatpush2.msra.mxu0 0.0
  %252 = vmatprep.subr.mxu0 0.0
  %253 = vmatpush2.msra.mxu0 0.0
  %254 = vmatprep.subr.mxu0 0.0
  %255 = vmatpush2.msra.mxu0 0.0
  %256 = vmatprep.subr.mxu0 0.0
  %257 = vmatpush2.msra.mxu0 0.0
  %258 = vmatprep.subr.mxu0 0.0
  %259 = vmatpush2.msra.mxu0 0.0
  %260 = vmatprep.subr.mxu0 0.0
  %261 = vmatpush2.msra.mxu0 0.0
  %262 = vmatprep.subr.mxu0 0.0
  %263 = vmatpush2.msra.mxu0 0.0
  %264 = vmatprep.subr.mxu0 0.0
  %265 = vmatpush2.msra.mxu0 0.0
  %266 = vmatprep.subr.mxu0 0.0
  %267 = vmatpush2.msra.mxu0 0.0
  %268 = vmatprep.subr.mxu0 0.0
  %269 = vmatpush2.msra.mxu0 0.0
  %270 = vmatprep.subr.mxu0 0.0
  %271 = vmatpush2.msra.mxu0 0.0
  %272 = vmatprep.mubr.f32.mxu0 0.0
  %273 = vmatmul.mubr.f32.gmra.mxu0 %v206
  %v274 = vpop.f32.mrf.mxu0
  %v275 = vadd.f32 0.0, %v274
  %v276 = vpop.f32.mrf.mxu0
  %277 = vmatprep.mubr.f32.mxu0 0.0
  %278 = vmatmul.mubr.f32.gmra.mxu0 %v207
  %v279 = vpop.f32.mrf.mxu0
  %v280 = vadd.f32 0.0, %v279
  %v281 = vpop.f32.mrf.mxu0
  %282 = vdwg.mxu0
  %v283 = vld [vmem:[%s3] sm:$0xff]
  %v284 = vld [vmem:[%s3 + $0x8] sm:$0xff]
  %v285 = vmul.f32 %v275, %v283
  %v286 = vmul.f32 %v280, %v284
  %v287 = vld [vmem:[#allocation2] sm:$0xff]
  %v288 = vld [vmem:[#allocation2 + $0x8] sm:$0xff]
  %v289 = vadd.f32 %v287, %v285
  %v290 = vadd.f32 %v288, %v286
  %291 = vst [vmem:[#allocation2] sm:$0xff] %v289
  %292 = vst [vmem:[#allocation2 + $0x8] sm:$0xff] %v290
  // Predicated region
  $region22: #{masked_kernel_sums.1} parent=0 // pred_check
    %p293 = pneg %p17
  $region23: #{masked_kernel_sums.1} parent=0 // pred_check_branch
    %295 = sbr.rel (%p293) target = $region25
  $region24: #{masked_kernel_sums.1} parent=0 // pred_region
    %v296 = vld [vmem:[#allocation2] sm:$0xff]
    %v297 = vld [vmem:[#allocation2 + $0x8] sm:$0xff]
    %298 = vst [vmem:[%s4] sm:$0xff] %v296
    %299 = vst [vmem:[%s4 + $0x8] sm:$0xff] %v297
  $region25: #{masked_kernel_sums.1} parent=0 // pred_fallthru
    _
  // Predicated region
  $region26: #{masked_kernel_sums.1} parent=0 // pred_check
    _
  $region27: #{masked_kernel_sums.1} parent=0 // pred_check_branch
    %301 = sbr.rel (0) target = $region29
  $region28: #{masked_kernel_sums.1} parent=0 // pred_region
    _
  $region29: #{masked_kernel_sums.1} parent=0 // pred_fallthru
    _
  // Predicated region
  $region30: #{masked_kernel_sums.1} parent=0 // pred_check
    _
  $region31: #{masked_kernel_sums.1} parent=0 // pred_check_branch
    %303 = sbr.rel (0) target = $region33
  $region32: #{masked_kernel_sums.1} parent=0 // pred_region
    _
  $region33: #{masked_kernel_sums.1} parent=0 // pred_fallthru
    _

</llo_original>
